<compile_context>
chip_gen: v7x
topology: tpu7x:2x2x1
jax: 0.10.0
libtpu: 0.0.40
codegen_flags: <defaults>
</compile_context>

<pallas_src>
import functools
import math

import jax
import jax.numpy as jnp
from jax.experimental import pallas as pl
from jax.experimental.pallas import tpu as pltpu


def _mhsa_kernel(x_ref, wq_ref, wk_ref, wv_ref, wo_ref, o_ref, *, exact_recip):
    """x_ref: (Bblk, S, D); wq/wk/wv: (D, A); wo_ref: (A, D) head-folded."""
    bb, S, D = x_ref.shape
    A = wq_ref.shape[1]
    cdt = wq_ref.dtype

    # Flatten batch into the matmul M dimension so each projection feeds the
    # MXU bb*S rows at once (one dot per projection per grid step).
    x_flat = x_ref[...].reshape(bb * S, D)

    # Three separate, lane-aligned projections (A < 128, so a fused (D, 3A)
    # weight would force non-lane-aligned column slices inside the kernel).
    q = jnp.dot(x_flat, wq_ref[...], preferred_element_type=jnp.float32)
    k = jnp.dot(x_flat, wk_ref[...], preferred_element_type=jnp.float32)
    v = jnp.dot(x_flat, wv_ref[...], preferred_element_type=jnp.float32)
    q = q.astype(cdt).reshape(bb, S, A)   # 1/sqrt(model_dim) already folded in
    k = k.astype(cdt).reshape(bb, S, A)
    v = v.astype(cdt).reshape(bb, S, A)

    # Per-batch attention; the full f32 (S, S) scores stay in VMEM (fine for
    # small S).
    # TODO(synk): for large S, switch to flash-style q/kv tiling with an
    # online-softmax accumulator and the kv axis last in the grid ("arbitrary").
    s = jnp.einsum("bqa,bka->bqk", q, k,
                   preferred_element_type=jnp.float32)        # (bb, S, S)
    s = s - jnp.max(s, axis=-1, keepdims=True)
    p = jnp.exp(s)
    l = jnp.sum(p, axis=-1, keepdims=True)
    if exact_recip:
        p = p / l                                  # exact division: f32 parity
    else:
        p = p * pl.reciprocal(l, approx=True)      # EUP slot, effectively free

    z = jnp.einsum("bqk,bka->bqa", p.astype(cdt), v,
                   preferred_element_type=jnp.float32)        # (bb, S, A)

    # Output projection against the head-folded (A, D) weight: one flattened
    # matmul and a single lane/sublane-dense output store for the whole block.
    z_flat = z.reshape(bb * S, A).astype(cdt)
    out = jnp.dot(z_flat, wo_ref[...],
                  preferred_element_type=jnp.float32)         # (bb*S, D)
    o_ref[...] = out.reshape(bb, S, D).astype(o_ref.dtype)


def _pick_batch_block(B, S, D, itemsize, target_block_bytes=2 << 20):
    """Largest divisor of B giving >= 2 grid steps (engages v7x's second TC)
    with an x/out block of at most ~2 MiB (keeps double-buffering alive)."""
    best = None
    for d in range(1, B + 1):
        if B % d:
            continue
        if B // d >= 2 and d * S * D * itemsize <= target_block_bytes:
            best = d
    if best is None:
        best = B if B == 1 else 1
    return best


def multi_head_self_attention(x, wq, wk, wv, wo, *, num_heads,
                              compute_dtype=jnp.bfloat16,
                              out_dtype=None, batch_block=None):
    """x: (B, S, D). wq/wk/wv: (A, D) torch-Linear layout. wo: (D, H*A)."""
    B, S, D = x.shape
    A = wq.shape[0]
    # The PyTorch module aliases ONE AttentionHead num_heads times; W_out
    # folding below is only valid under that shared-weight assumption.
    assert wo.shape == (D, num_heads * A), "wo must be (model_dim, H*attn_dim)"
    scale = 1.0 / math.sqrt(D)   # torch code scales by sqrt(model_dim)

    if out_dtype is None:
        out_dtype = x.dtype
    if batch_block is None:
        batch_block = _pick_batch_block(
            B, S, D, jnp.dtype(compute_dtype).itemsize)
    assert B % batch_block == 0
    n_b = B // batch_block

    # --- weight prep (plain JAX glue, done once on weights, not per token) ---
    wq_s = wq.T * scale                                        # (D, A) scaled
    wk_t = wk.T                                                # (D, A)
    wv_t = wv.T                                                # (D, A)
    # Heads share weights -> fold W_out's head blocks: (H*A, D) -> (A, D).
    wo_fold = wo.T.reshape(num_heads, A, D).sum(axis=0)        # (A, D)

    cdt = compute_dtype
    x_c = x.astype(cdt)
    wq_s = wq_s.astype(cdt)
    wk_t = wk_t.astype(cdt)
    wv_t = wv_t.astype(cdt)
    wo_fold = wo_fold.astype(cdt)

    exact_recip = jnp.dtype(compute_dtype) == jnp.dtype(jnp.float32)
    kernel = functools.partial(_mhsa_kernel, exact_recip=exact_recip)

    return pl.pallas_call(
        kernel,
        out_shape=jax.ShapeDtypeStruct((B, S, D), out_dtype),
        grid_spec=pltpu.PrefetchScalarGridSpec(
            num_scalar_prefetch=0,
            grid=(n_b,),
            in_specs=[
                pl.BlockSpec((batch_block, S, D), lambda g: (g, 0, 0)),  # x
                pl.BlockSpec((D, A), lambda g: (0, 0)),                  # Wq*s
                pl.BlockSpec((D, A), lambda g: (0, 0)),                  # Wk
                pl.BlockSpec((D, A), lambda g: (0, 0)),                  # Wv
                pl.BlockSpec((A, D), lambda g: (0, 0)),                  # Wout fold
            ],
            out_specs=pl.BlockSpec((batch_block, S, D), lambda g: (g, 0, 0)),
        ),
        compiler_params=pltpu.CompilerParams(
            dimension_semantics=("parallel",),
            # 32 MiB scoped-VMEM ceiling: fits comfortably inside v7x's 64 MiB
            # physical VMEM (double-buffered blocks are <= ~4 MiB each here)
            # and is trivially safe on v5e/v6e (128 MiB).
            vmem_limit_bytes=32 * 1024 * 1024,
        ),
    )(x_c, wq_s, wk_t, wv_t, wo_fold)


def _reference(x, wq, wk, wv, wo, *, num_heads):
    # Pure-JAX f32 reference mirroring the PyTorch forward exactly.
    D = x.shape[-1]
    q = x @ wq.T
    k = x @ wk.T
    v = x @ wv.T
    s = jnp.einsum("bqa,bka->bqk", q, k) / math.sqrt(D)
    p = jax.nn.softmax(s, axis=2)
    z = jnp.einsum("bqk,bka->bqa", p, v)
    z_concat = jnp.concatenate([z] * num_heads, axis=2)
    return z_concat @ wo.T


if __name__ == "__main__":
    # Small shapes consistent with the module.
    B, S = 2, 8
    model_dim = 32
    attn_dim = 16
    num_heads = 4

    key = jax.random.PRNGKey(0)
    kx, kq, kk, kv, ko = jax.random.split(key, 5)

    x = jax.random.normal(kx, (B, S, model_dim), dtype=jnp.float32)

    # torch nn.Linear weight layout: (out_features, in_features)
    wq = jax.random.normal(kq, (attn_dim, model_dim), jnp.float32) * 0.02
    wk = jax.random.normal(kk, (attn_dim, model_dim), jnp.float32) * 0.02
    wv = jax.random.normal(kv, (attn_dim, model_dim), jnp.float32) * 0.02
    wo = jax.random.normal(ko, (model_dim, attn_dim * num_heads),
                           jnp.float32) * 0.02

    ref = _reference(x, wq, wk, wv, wo, num_heads=num_heads)

    # f32-compute path: exact softmax division -> tight parity check.
    out_f32 = multi_head_self_attention(x, wq, wk, wv, wo, num_heads=num_heads,
                                        compute_dtype=jnp.float32)
    out_f32 = jax.block_until_ready(out_f32)
    assert out_f32.shape == (B, S, model_dim)
    assert jnp.allclose(out_f32, ref, atol=1e-3, rtol=1e-3), (
        f"f32 mismatch: {jnp.max(jnp.abs(out_f32 - ref))}")

    # bf16-MXU path (the performance configuration): looser tolerance.
    out_bf16 = multi_head_self_attention(x, wq, wk, wv, wo,
                                         num_heads=num_heads,
                                         compute_dtype=jnp.bfloat16)
    out_bf16 = jax.block_until_ready(out_bf16)
    assert out_bf16.shape == (B, S, model_dim)
    assert jnp.allclose(out_bf16.astype(jnp.float32), ref,
                        atol=2e-2, rtol=2e-2), (
        f"bf16 mismatch: {jnp.max(jnp.abs(out_bf16.astype(jnp.float32) - ref))}")

    print("KERNEL_OK")
</pallas_src>

<mosaic_0001>
module attributes {stable_mosaic.version = 11 : i64} {
  func.func @_mhsa_kernel(%arg0: i32, %arg1: memref<1x8x32xf32, #tpu.memory_space<vmem>>, %arg2: memref<32x16xf32, #tpu.memory_space<vmem>>, %arg3: memref<32x16xf32, #tpu.memory_space<vmem>>, %arg4: memref<32x16xf32, #tpu.memory_space<vmem>>, %arg5: memref<16x32xf32, #tpu.memory_space<vmem>>, %arg6: memref<1x8x32xf32, #tpu.memory_space<vmem>>) attributes {dimension_semantics = [#tpu.dimension_semantics<parallel>], iteration_bounds = array<i64: 2>, scalar_prefetch = 0 : i64, scratch_operands = 0 : i64, tpu.core_type = #tpu.core_type<tc>, window_params = [{transform_indices = @transform_0, window_bounds = array<i64: 1, 8, 32>}, {pipeline_mode = #tpu.pipeline_mode<synchronous>, transform_indices = @transform_1, window_bounds = array<i64: 32, 16>}, {pipeline_mode = #tpu.pipeline_mode<synchronous>, transform_indices = @transform_2, window_bounds = array<i64: 32, 16>}, {pipeline_mode = #tpu.pipeline_mode<synchronous>, transform_indices = @transform_3, window_bounds = array<i64: 32, 16>}, {pipeline_mode = #tpu.pipeline_mode<synchronous>, transform_indices = @transform_4, window_bounds = array<i64: 16, 32>}, {transform_indices = @transform_5, window_bounds = array<i64: 1, 8, 32>}]} {
    %c0 = arith.constant 0 : index
    %c0_0 = arith.constant 0 : index
    %c0_1 = arith.constant 0 : index
    %0 = vector.load %arg1[%c0, %c0_0, %c0_1] : memref<1x8x32xf32, #tpu.memory_space<vmem>>, vector<1x8x32xf32>
    %1 = vector.shape_cast %0 : vector<1x8x32xf32> to vector<8x32xf32>
    %c0_2 = arith.constant 0 : index
    %c0_3 = arith.constant 0 : index
    %2 = vector.load %arg2[%c0_2, %c0_3] : memref<32x16xf32, #tpu.memory_space<vmem>>, vector<32x16xf32>
    %cst = arith.constant dense<0.000000e+00> : vector<8x16xf32>
    %3 = tpu.matmul %1, %2, %cst {dimension_numbers = #tpu.dot_dimension_numbers<[1], [0], [0], [1], [0, 0, 1, 1], [], []>} : vector<8x32xf32>, vector<32x16xf32>, vector<8x16xf32> -> vector<8x16xf32>
    %c0_4 = arith.constant 0 : index
    %c0_5 = arith.constant 0 : index
    %4 = vector.load %arg3[%c0_4, %c0_5] : memref<32x16xf32, #tpu.memory_space<vmem>>, vector<32x16xf32>
    %cst_6 = arith.constant dense<0.000000e+00> : vector<8x16xf32>
    %5 = tpu.matmul %1, %4, %cst_6 {dimension_numbers = #tpu.dot_dimension_numbers<[1], [0], [0], [1], [0, 0, 1, 1], [], []>} : vector<8x32xf32>, vector<32x16xf32>, vector<8x16xf32> -> vector<8x16xf32>
    %c0_7 = arith.constant 0 : index
    %c0_8 = arith.constant 0 : index
    %6 = vector.load %arg4[%c0_7, %c0_8] : memref<32x16xf32, #tpu.memory_space<vmem>>, vector<32x16xf32>
    %cst_9 = arith.constant dense<0.000000e+00> : vector<8x16xf32>
    %7 = tpu.matmul %1, %6, %cst_9 {dimension_numbers = #tpu.dot_dimension_numbers<[1], [0], [0], [1], [0, 0, 1, 1], [], []>} : vector<8x32xf32>, vector<32x16xf32>, vector<8x16xf32> -> vector<8x16xf32>
    %8 = vector.shape_cast %3 : vector<8x16xf32> to vector<1x8x16xf32>
    %9 = vector.shape_cast %5 : vector<8x16xf32> to vector<1x8x16xf32>
    %10 = vector.shape_cast %7 : vector<8x16xf32> to vector<1x8x16xf32>
    "tpu.trace_start"() <{level = 10 : i32, message = "bqa,bka->bqk"}> : () -> ()
    %cst_10 = arith.constant dense<0.000000e+00> : vector<1x8x8xf32>
    %11 = tpu.matmul %8, %9, %cst_10 {dimension_numbers = #tpu.dot_dimension_numbers<[2], [2], [1], [1], [0, 0, 0, 1, 1, 1], [0], [0]>} : vector<1x8x16xf32>, vector<1x8x16xf32>, vector<1x8x8xf32> -> vector<1x8x8xf32>
    "tpu.trace_stop"() : () -> ()
    %cst_11 = arith.constant dense<0xFF800000> : vector<1x8xf32>
    %12 = vector.multi_reduction <maximumf>, %11, %cst_11 [2] : vector<1x8x8xf32> to vector<1x8xf32>
    %13 = vector.shape_cast %12 : vector<1x8xf32> to vector<1x8x1xf32>
    %14 = vector.broadcast %13 : vector<1x8x1xf32> to vector<1x8x8xf32>
    %15 = arith.subf %11, %14 : vector<1x8x8xf32>
    %16 = math.exp %15 : vector<1x8x8xf32>
    %cst_12 = arith.constant dense<0.000000e+00> : vector<1x8xf32>
    %17 = vector.multi_reduction <add>, %16, %cst_12 [2] : vector<1x8x8xf32> to vector<1x8xf32>
    %18 = vector.shape_cast %17 : vector<1x8xf32> to vector<1x8x1xf32>
    %19 = vector.broadcast %18 : vector<1x8x1xf32> to vector<1x8x8xf32>
    %20 = arith.divf %16, %19 : vector<1x8x8xf32>
    "tpu.trace_start"() <{level = 10 : i32, message = "bqk,bka->bqa"}> : () -> ()
    %cst_13 = arith.constant dense<0.000000e+00> : vector<1x8x16xf32>
    %21 = tpu.matmul %20, %10, %cst_13 {dimension_numbers = #tpu.dot_dimension_numbers<[2], [1], [1], [2], [0, 0, 0, 1, 1, 2], [0], [0]>} : vector<1x8x8xf32>, vector<1x8x16xf32>, vector<1x8x16xf32> -> vector<1x8x16xf32>
    "tpu.trace_stop"() : () -> ()
    %22 = vector.shape_cast %21 : vector<1x8x16xf32> to vector<8x16xf32>
    %c0_14 = arith.constant 0 : index
    %c0_15 = arith.constant 0 : index
    %23 = vector.load %arg5[%c0_14, %c0_15] : memref<16x32xf32, #tpu.memory_space<vmem>>, vector<16x32xf32>
    %cst_16 = arith.constant dense<0.000000e+00> : vector<8x32xf32>
    %24 = tpu.matmul %22, %23, %cst_16 {dimension_numbers = #tpu.dot_dimension_numbers<[1], [0], [0], [1], [0, 0, 1, 1], [], []>} : vector<8x16xf32>, vector<16x32xf32>, vector<8x32xf32> -> vector<8x32xf32>
    %25 = vector.shape_cast %24 : vector<8x32xf32> to vector<1x8x32xf32>
    %c0_17 = arith.constant 0 : index
    %c0_18 = arith.constant 0 : index
    %c0_19 = arith.constant 0 : index
    %26 = vector.load %arg6[%c0_17, %c0_18, %c0_19] : memref<1x8x32xf32, #tpu.memory_space<vmem>>, vector<1x8x32xf32>
    tpu.vector_store %arg6[%c0_17, %c0_18, %c0_19], %25 {strides = array<i32>} : memref<1x8x32xf32, #tpu.memory_space<vmem>>, vector<1x8x32xf32>,
    return
  }
  func.func @transform_0(%arg0: i32) -> (i32, i32, i32) {
    %c0_i32 = arith.constant 0 : i32
    %c0_i32_0 = arith.constant 0 : i32
    %c0_i32_1 = arith.constant 0 : i32
    return %arg0, %c0_i32, %c0_i32_0 : i32, i32, i32
  }
  func.func @transform_1(%arg0: i32) -> (i32, i32) {
    %c0_i32 = arith.constant 0 : i32
    %c0_i32_0 = arith.constant 0 : i32
    %c0_i32_1 = arith.constant 0 : i32
    return %c0_i32, %c0_i32_0 : i32, i32
  }
  func.func @transform_2(%arg0: i32) -> (i32, i32) {
    %c0_i32 = arith.constant 0 : i32
    %c0_i32_0 = arith.constant 0 : i32
    %c0_i32_1 = arith.constant 0 : i32
    return %c0_i32, %c0_i32_0 : i32, i32
  }
  func.func @transform_3(%arg0: i32) -> (i32, i32) {
    %c0_i32 = arith.constant 0 : i32
    %c0_i32_0 = arith.constant 0 : i32
    %c0_i32_1 = arith.constant 0 : i32
    return %c0_i32, %c0_i32_0 : i32, i32
  }
  func.func @transform_4(%arg0: i32) -> (i32, i32) {
    %c0_i32 = arith.constant 0 : i32
    %c0_i32_0 = arith.constant 0 : i32
    %c0_i32_1 = arith.constant 0 : i32
    return %c0_i32, %c0_i32_0 : i32, i32
  }
  func.func @transform_5(%arg0: i32) -> (i32, i32, i32) {
    %c0_i32 = arith.constant 0 : i32
    %c0_i32_0 = arith.constant 0 : i32
    %c0_i32_1 = arith.constant 0 : i32
    return %arg0, %c0_i32, %c0_i32_0 : i32, i32, i32
  }
}

</mosaic_0001>

<llo_original>
// kernel: tpu_custom_call.1
$region0: #{tpu_custom_call.1}
  #allocation0 [shape = 'u32[]', space=smem, size = 0x4, offset = 0x4, fixed_abs, tag = 'smem constant byte address 0x4 - core index']
  #allocation1 [shape = 'u32[144,128]{1,0:T(1,128)}', space=vmem, size = 0x12000, scoped, tag = 'internal scratch']
  %s0 = inlined_call_operand.vmem [shape: f32[2,8,32], index: 0, kind: input, shape index: {}]
  %s1 = inlined_call_operand.vmem [shape: f32[32,16], index: 1, kind: input, shape index: {}]
  %s2 = inlined_call_operand.vmem [shape: f32[32,16], index: 2, kind: input, shape index: {}]
  %s3 = inlined_call_operand.vmem [shape: f32[32,16], index: 3, kind: input, shape index: {}]
  %s4 = inlined_call_operand.vmem [shape: f32[16,32], index: 4, kind: input, shape index: {}]
  %s5 = inlined_call_operand.hbm [shape: f32[2,8,32], index: 5, kind: output, shape index: {}]
  %s6 = sld [smem:[#allocation0]]
  $region53: #{tpu_custom_call.1} parent=0
    _
  %s8 = ssub.s32 1, %s6
  %s9 = scalar_select 0, %s8, %s6
  $region1: #{tpu_custom_call.1} parent=0
    #allocation2 [shape = 'u8[8192]{0}', space=vmem, size = 0x2000, scoped, tag = 'output window, operand 0']
    #allocation3 [shape = 's32[2]{0}', space=sflag, size = 0x8, scoped, tag = 'scoped memory for tpu_custom_call.1']
    %10 = vsyncpa [#allocation3], 0
    %s11 = scalar_lea.sflag [#allocation3], 1
    %12 = vsyncpa %s11, 0
    loop: start=0, step=1, limit=4
    $region2: #{tpu_custom_call.1} parent=1 // loop_pre_header
      _
    $region3: #{tpu_custom_call.1} parent=1 // loop_header
      %s14 = sphi 0, %s18
      %p15 = scmp.ge.s32.totalorder %s14, 4
      %s24 = sphi 0, %s26
      %s27 = sphi 0, %s24
      %s28 = sphi 0, %s27
      %s44 = sphi 0, %s28
      %s48 = sphi 0, %s48
      %s50 = sphi 0, %s48
      %s51 = sphi 0, %s50
      %s65 = sphi 0, %s51
      %s69 = sphi 0, %s69
      %s71 = sphi 0, %s69
      %s72 = sphi 0, %s71
      %s86 = sphi 0, %s72
      %s90 = sphi 0, %s90
      %s92 = sphi 0, %s90
      %s93 = sphi 0, %s92
      %s107 = sphi 0, %s93
      %s111 = sphi 0, %s111
      %s113 = sphi 0, %s111
      %s114 = sphi 0, %s113
      %s128 = sphi 0, %s114
      %s134 = sphi 0, %s136
      %s137 = sphi 0, %s134
      %s138 = sphi 0, %s137
      %s154 = sphi 0, %s138
    $region4: #{tpu_custom_call.1} parent=1 // loop_header_branch
      %17 = sbr.rel (%p15) target = $region8
    $region5: #{tpu_custom_call.1} parent=1 // loop_body
      %s19 = ssub.s32 %s14, 1
      %s20 = ssub.s32 %s14, 2
      %s21 = sadd.s32 %s14, 1
      %s22 = ssub.s32 %s14, %s21
      %p23 = scmp.eq.s32.totalorder %s22, 0
      %s25 = sadd.s32 %s24, 1
      %s26 = scalar_select %p23, %s24, %s25
      %p29 = pneg %p23
      %p30 = scmp.eq.s32.totalorder %s14, 1
      %p31 = por %p29, %p30
      %p32 = scmp.ne.s32.totalorder %s24, %s27
      %p33 = scmp.eq.s32.totalorder %s14, 0
      %p34 = por %p32, %p33
      %p35 = scmp.ne.s32.totalorder %s24, %s27
      %p36 = scmp.eq.s32.totalorder %s19, 1
      %p37 = por %p35, %p36
      %p38 = scmp.ne.s32.totalorder %s27, %s28
      %p39 = scmp.eq.s32.totalorder %s19, 0
      %p40 = por %p38, %p39
      %p41 = scmp.ne.s32.totalorder %s27, %s28
      %p42 = scmp.eq.s32.totalorder %s20, 1
      %p43 = por %p41, %p42
      %p45 = scmp.ne.s32.totalorder %s28, %s44
      %p46 = scmp.eq.s32.totalorder %s20, 0
      %p47 = por %p45, %p46
      %s49 = sadd.s32 %s48, 1
      %p52 = scmp.eq.s32.totalorder %s14, 1
      %p53 = scmp.ne.s32.totalorder %s48, %s50
      %p54 = scmp.eq.s32.totalorder %s14, 0
      %p55 = por %p53, %p54
      %p56 = scmp.ne.s32.totalorder %s48, %s50
      %p57 = scmp.eq.s32.totalorder %s19, 1
      %p58 = por %p56, %p57
      %p59 = scmp.ne.s32.totalorder %s50, %s51
      %p60 = scmp.eq.s32.totalorder %s19, 0
      %p61 = por %p59, %p60
      %p62 = scmp.ne.s32.totalorder %s50, %s51
      %p63 = scmp.eq.s32.totalorder %s20, 1
      %p64 = por %p62, %p63
      %p66 = scmp.ne.s32.totalorder %s51, %s65
      %p67 = scmp.eq.s32.totalorder %s20, 0
      %p68 = por %p66, %p67
      %s70 = sadd.s32 %s69, 1
      %p73 = scmp.eq.s32.totalorder %s14, 1
      %p74 = scmp.ne.s32.totalorder %s69, %s71
      %p75 = scmp.eq.s32.totalorder %s14, 0
      %p76 = por %p74, %p75
      %p77 = scmp.ne.s32.totalorder %s69, %s71
      %p78 = scmp.eq.s32.totalorder %s19, 1
      %p79 = por %p77, %p78
      %p80 = scmp.ne.s32.totalorder %s71, %s72
      %p81 = scmp.eq.s32.totalorder %s19, 0
      %p82 = por %p80, %p81
      %p83 = scmp.ne.s32.totalorder %s71, %s72
      %p84 = scmp.eq.s32.totalorder %s20, 1
      %p85 = por %p83, %p84
      %p87 = scmp.ne.s32.totalorder %s72, %s86
      %p88 = scmp.eq.s32.totalorder %s20, 0
      %p89 = por %p87, %p88
      %s91 = sadd.s32 %s90, 1
      %p94 = scmp.eq.s32.totalorder %s14, 1
      %p95 = scmp.ne.s32.totalorder %s90, %s92
      %p96 = scmp.eq.s32.totalorder %s14, 0
      %p97 = por %p95, %p96
      %p98 = scmp.ne.s32.totalorder %s90, %s92
      %p99 = scmp.eq.s32.totalorder %s19, 1
      %p100 = por %p98, %p99
      %p101 = scmp.ne.s32.totalorder %s92, %s93
      %p102 = scmp.eq.s32.totalorder %s19, 0
      %p103 = por %p101, %p102
      %p104 = scmp.ne.s32.totalorder %s92, %s93
      %p105 = scmp.eq.s32.totalorder %s20, 1
      %p106 = por %p104, %p105
      %p108 = scmp.ne.s32.totalorder %s93, %s107
      %p109 = scmp.eq.s32.totalorder %s20, 0
      %p110 = por %p108, %p109
      %s112 = sadd.s32 %s111, 1
      %p115 = scmp.eq.s32.totalorder %s14, 1
      %p116 = scmp.ne.s32.totalorder %s111, %s113
      %p117 = scmp.eq.s32.totalorder %s14, 0
      %p118 = por %p116, %p117
      %p119 = scmp.ne.s32.totalorder %s111, %s113
      %p120 = scmp.eq.s32.totalorder %s19, 1
      %p121 = por %p119, %p120
      %p122 = scmp.ne.s32.totalorder %s113, %s114
      %p123 = scmp.eq.s32.totalorder %s19, 0
      %p124 = por %p122, %p123
      %p125 = scmp.ne.s32.totalorder %s113, %s114
      %p126 = scmp.eq.s32.totalorder %s20, 1
      %p127 = por %p125, %p126
      %p129 = scmp.ne.s32.totalorder %s114, %s128
      %p130 = scmp.eq.s32.totalorder %s20, 0
      %p131 = por %p129, %p130
      %s132 = ssub.s32 %s14, %s21
      %p133 = scmp.eq.s32.totalorder %s132, 0
      %s135 = sadd.s32 %s134, 1
      %s136 = scalar_select %p133, %s134, %s135
      %p139 = pneg %p133
      %p140 = scmp.eq.s32.totalorder %s14, 1
      %p141 = por %p139, %p140
      %p142 = scmp.ne.s32.totalorder %s134, %s137
      %p143 = scmp.eq.s32.totalorder %s14, 0
      %p144 = por %p142, %p143
      %p145 = scmp.ne.s32.totalorder %s134, %s137
      %p146 = scmp.eq.s32.totalorder %s19, 1
      %p147 = por %p145, %p146
      %p148 = scmp.ne.s32.totalorder %s137, %s138
      %p149 = scmp.eq.s32.totalorder %s19, 0
      %p150 = por %p148, %p149
      %p151 = scmp.ne.s32.totalorder %s137, %s138
      %p152 = scmp.eq.s32.totalorder %s20, 1
      %p153 = por %p151, %p152
      %p155 = scmp.ne.s32.totalorder %s138, %s154
      %p156 = scmp.eq.s32.totalorder %s20, 0
      %p157 = por %p155, %p156
      %p158 = scmp.le.s32.totalorder 1, %s14
      %p159 = scmp.lt.s32.totalorder %s14, 3
      %p160 = pnand %p158, %p159
      %p161 = pneg %p160
      // Predicated region
      $region9: #{tpu_custom_call.1} parent=5 // pred_check
        _
      $region10: #{tpu_custom_call.1} parent=5 // pred_check_branch
        %163 = sbr.rel (%p160) target = $region12
      $region11: #{tpu_custom_call.1} parent=5 // pred_region
        %s164 = ssub.s32 %s14, 1
        // Predicated region
        $region13: #{tpu_custom_call.1} parent=11 // pred_check
          %p165 = pneg %p61
        $region14: #{tpu_custom_call.1} parent=11 // pred_check_branch
          %167 = sbr.rel (%p165) target = $region16
        $region15: #{tpu_custom_call.1} parent=11 // pred_region
          _
        $region16: #{tpu_custom_call.1} parent=11 // pred_fallthru
          _
        // Predicated region
        $region17: #{tpu_custom_call.1} parent=11 // pred_check
          %p168 = pneg %p82
        $region18: #{tpu_custom_call.1} parent=11 // pred_check_branch
          %170 = sbr.rel (%p168) target = $region20
        $region19: #{tpu_custom_call.1} parent=11 // pred_region
          _
        $region20: #{tpu_custom_call.1} parent=11 // pred_fallthru
          _
        // Predicated region
        $region21: #{tpu_custom_call.1} parent=11 // pred_check
          %p171 = pneg %p103
        $region22: #{tpu_custom_call.1} parent=11 // pred_check_branch
          %173 = sbr.rel (%p171) target = $region24
        $region23: #{tpu_custom_call.1} parent=11 // pred_region
          _
        $region24: #{tpu_custom_call.1} parent=11 // pred_fallthru
          _
        // Predicated region
        $region25: #{tpu_custom_call.1} parent=11 // pred_check
          %p174 = pneg %p124
        $region26: #{tpu_custom_call.1} parent=11 // pred_check_branch
          %176 = sbr.rel (%p174) target = $region28
        $region27: #{tpu_custom_call.1} parent=11 // pred_region
          _
        $region28: #{tpu_custom_call.1} parent=11 // pred_fallthru
          _
      $region12: #{tpu_custom_call.1} parent=5 // pred_fallthru
        _
      %p177 = scmp.lt.s32.totalorder %s14, 2
      // Predicated region
      $region29: #{tpu_custom_call.1} parent=5 // pred_check
        %p178 = pneg %p177
      $region30: #{tpu_custom_call.1} parent=5 // pred_check_branch
        %180 = sbr.rel (%p178) target = $region32
      $region31: #{tpu_custom_call.1} parent=5 // pred_region
        // Predicated region
        $region33: #{tpu_custom_call.1} parent=31 // pred_check
          %p181 = pneg %p34
        $region34: #{tpu_custom_call.1} parent=31 // pred_check_branch
          %183 = sbr.rel (%p181) target = $region36
        $region35: #{tpu_custom_call.1} parent=31 // pred_region
          %p184 = scmp.lt.s32.totalorder %s14, 1
          %s185 = scalar_select %p184, %s14, 1
          %s186 = smul.addr %s185, 8
          %s187 = scalar_lea.vmem %s0, %s186
        $region36: #{tpu_custom_call.1} parent=31 // pred_fallthru
          _
      $region32: #{tpu_custom_call.1} parent=5 // pred_fallthru
        _
      %p188 = scmp.le.s32.totalorder 1, %s14
      %p189 = scmp.lt.s32.totalorder %s14, 3
      %p190 = pnand %p188, %p189
      %p191 = pneg %p190
      // Predicated region
      $region37: #{tpu_custom_call.1} parent=5 // pred_check
        _
      $region38: #{tpu_custom_call.1} parent=5 // pred_check_branch
        %193 = sbr.rel (%p190) target = $region40
      $region39: #{tpu_custom_call.1} parent=5 // pred_region
        %s194 = ssub.s32 %s14, 1
        %p195 = scmp.lt.s32.totalorder %s19, 1
        %s196 = scalar_select %p195, %s19, 1
        %s197 = smul.addr %s196, 8
        %s198 = scalar_lea.vmem %s0, %s197
        %p199 = pneg %p40
        %p200 = pneg %p37
        %p201 = pneg %p61
        %p202 = pneg %p58
        %p203 = pneg %p82
        %p204 = pneg %p79
        %p205 = pneg %p103
        %p206 = pneg %p100
        %p207 = pneg %p124
        %p208 = pneg %p121
        %p209 = pneg %p150
        %p210 = pneg %p147
        %s211 = sand.u32 %s137, 1
        %s212 = scalar_lea.sflag [#allocation3], %s211
        %s213 = sand.u32 %s137, 1
        %s214 = smul.addr %s213, 8
        %s215 = scalar_lea.vmem [#allocation2], %s214
        %p216 = scmp.lt.s32.totalorder %s19, 1
        %s217 = scalar_select %p216, %s19, 1
        %s218 = smul.addr %s217, 8
        %s219 = scalar_lea.vmem %s0, %s218
        %v220 = vld [vmem:[%s219] sm:$0xff]
        %v221 = vld [vmem:[%s1] sm:$0xff]
        %v222 = vld [vmem:[%s1 + $0x8] sm:$0xff]
        %v223 = vld [vmem:[%s1 + $0x10] sm:$0xff]
        %v224 = vld [vmem:[%s1 + $0x18] sm:$0xff]
        %vm225 = vcmask 261120
        %v227 = vsel %vm225, %v220, 0
        %229 = vmatprep.subr.mxu0 0.0
        %230 = vmatpush1.msra.mxu0 %v221
        %231 = vmatprep.subr.mxu0 0.0
        %232 = vmatpush1.msra.mxu0 %v222
        %233 = vmatprep.subr.mxu0 0.0
        %234 = vmatpush1.msra.mxu0 %v223
        %235 = vmatprep.subr.mxu0 0.0
        %236 = vmatpush1.msra.mxu0 %v224
        %237 = vmatprep.subr.mxu0 0.0
        %238 = vmatpush1.msra.mxu0 0.0
        %239 = vmatprep.subr.mxu0 0.0
        %240 = vmatpush1.msra.mxu0 0.0
        %241 = vmatprep.subr.mxu0 0.0
        %242 = vmatpush1.msra.mxu0 0.0
        %243 = vmatprep.subr.mxu0 0.0
        %244 = vmatpush1.msra.mxu0 0.0
        %245 = vmatprep.subr.mxu0 0.0
        %246 = vmatpush1.msra.mxu0 0.0
        %247 = vmatprep.subr.mxu0 0.0
        %248 = vmatpush1.msra.mxu0 0.0
        %249 = vmatprep.subr.mxu0 0.0
        %250 = vmatpush1.msra.mxu0 0.0
        %251 = vmatprep.subr.mxu0 0.0
        %252 = vmatpush1.msra.mxu0 0.0
        %253 = vmatprep.subr.mxu0 0.0
        %254 = vmatpush1.msra.mxu0 0.0
        %255 = vmatprep.subr.mxu0 0.0
        %256 = vmatpush1.msra.mxu0 0.0
        %257 = vmatprep.subr.mxu0 0.0
        %258 = vmatpush1.msra.mxu0 0.0
        %259 = vmatprep.subr.mxu0 0.0
        %260 = vmatpush1.msra.mxu0 0.0
        %261 = vmatprep.subr.mxu0 0.0
        %262 = vmatpush1.msra.mxu0 0.0
        %263 = vmatprep.subr.mxu0 0.0
        %264 = vmatpush1.msra.mxu0 0.0
        %265 = vmatprep.subr.mxu0 0.0
        %266 = vmatpush1.msra.mxu0 0.0
        %267 = vmatprep.subr.mxu0 0.0
        %268 = vmatpush1.msra.mxu0 0.0
        %269 = vmatprep.subr.mxu0 0.0
        %270 = vmatpush1.msra.mxu0 0.0
        %271 = vmatprep.subr.mxu0 0.0
        %272 = vmatpush1.msra.mxu0 0.0
        %273 = vmatprep.subr.mxu0 0.0
        %274 = vmatpush1.msra.mxu0 0.0
        %275 = vmatprep.subr.mxu0 0.0
        %276 = vmatpush1.msra.mxu0 0.0
        %277 = vmatprep.subr.mxu0 0.0
        %278 = vmatpush1.msra.mxu0 0.0
        %279 = vmatprep.subr.mxu0 0.0
        %280 = vmatpush1.msra.mxu0 0.0
        %281 = vmatprep.subr.mxu0 0.0
        %282 = vmatpush1.msra.mxu0 0.0
        %283 = vmatprep.subr.mxu0 0.0
        %284 = vmatpush1.msra.mxu0 0.0
        %285 = vmatprep.subr.mxu0 0.0
        %286 = vmatpush1.msra.mxu0 0.0
        %287 = vmatprep.subr.mxu0 0.0
        %288 = vmatpush1.msra.mxu0 0.0
        %289 = vmatprep.subr.mxu0 0.0
        %290 = vmatpush1.msra.mxu0 0.0
        %291 = vmatprep.subr.mxu0 0.0
        %292 = vmatpush1.msra.mxu0 0.0
        %293 = vmatprep.mubr.f32.mxu0 0.0
        %294 = vmatmul.mubr.f32.gmra.mrb[0].mxu0 %v227
        %v295 = vpop.f32.mrb[0].mxu0
        %v296 = vadd.f32 0.0, %v295
        %v297 = vpop.f32.mrb[0].mxu0
        %298 = vdwg.mxu0
        %v299 = vld [vmem:[%s2] sm:$0xff]
        %v300 = vld [vmem:[%s2 + $0x8] sm:$0xff]
        %v301 = vld [vmem:[%s2 + $0x10] sm:$0xff]
        %v302 = vld [vmem:[%s2 + $0x18] sm:$0xff]
        %303 = vmatprep.subr.mxu0 0.0
        %304 = vmatpush1.msra.mxu0 %v299
        %305 = vmatprep.subr.mxu0 0.0
        %306 = vmatpush1.msra.mxu0 %v300
        %307 = vmatprep.subr.mxu0 0.0
        %308 = vmatpush1.msra.mxu0 %v301
        %309 = vmatprep.subr.mxu0 0.0
        %310 = vmatpush1.msra.mxu0 %v302
        %311 = vmatprep.subr.mxu0 0.0
        %312 = vmatpush1.msra.mxu0 0.0
        %313 = vmatprep.subr.mxu0 0.0
        %314 = vmatpush1.msra.mxu0 0.0
        %315 = vmatprep.subr.mxu0 0.0
        %316 = vmatpush1.msra.mxu0 0.0
        %317 = vmatprep.subr.mxu0 0.0
        %318 = vmatpush1.msra.mxu0 0.0
        %319 = vmatprep.subr.mxu0 0.0
        %320 = vmatpush1.msra.mxu0 0.0
        %321 = vmatprep.subr.mxu0 0.0
        %322 = vmatpush1.msra.mxu0 0.0
        %323 = vmatprep.subr.mxu0 0.0
        %324 = vmatpush1.msra.mxu0 0.0
        %325 = vmatprep.subr.mxu0 0.0
        %326 = vmatpush1.msra.mxu0 0.0
        %327 = vmatprep.subr.mxu0 0.0
        %328 = vmatpush1.msra.mxu0 0.0
        %329 = vmatprep.subr.mxu0 0.0
        %330 = vmatpush1.msra.mxu0 0.0
        %331 = vmatprep.subr.mxu0 0.0
        %332 = vmatpush1.msra.mxu0 0.0
        %333 = vmatprep.subr.mxu0 0.0
        %334 = vmatpush1.msra.mxu0 0.0
        %335 = vmatprep.subr.mxu0 0.0
        %336 = vmatpush1.msra.mxu0 0.0
        %337 = vmatprep.subr.mxu0 0.0
        %338 = vmatpush1.msra.mxu0 0.0
        %339 = vmatprep.subr.mxu0 0.0
        %340 = vmatpush1.msra.mxu0 0.0
        %341 = vmatprep.subr.mxu0 0.0
        %342 = vmatpush1.msra.mxu0 0.0
        %343 = vmatprep.subr.mxu0 0.0
        %344 = vmatpush1.msra.mxu0 0.0
        %345 = vmatprep.subr.mxu0 0.0
        %346 = vmatpush1.msra.mxu0 0.0
        %347 = vmatprep.subr.mxu0 0.0
        %348 = vmatpush1.msra.mxu0 0.0
        %349 = vmatprep.subr.mxu0 0.0
        %350 = vmatpush1.msra.mxu0 0.0
        %351 = vmatprep.subr.mxu0 0.0
        %352 = vmatpush1.msra.mxu0 0.0
        %353 = vmatprep.subr.mxu0 0.0
        %354 = vmatpush1.msra.mxu0 0.0
        %355 = vmatprep.subr.mxu0 0.0
        %356 = vmatpush1.msra.mxu0 0.0
        %357 = vmatprep.subr.mxu0 0.0
        %358 = vmatpush1.msra.mxu0 0.0
        %359 = vmatprep.subr.mxu0 0.0
        %360 = vmatpush1.msra.mxu0 0.0
        %361 = vmatprep.subr.mxu0 0.0
        %362 = vmatpush1.msra.mxu0 0.0
        %363 = vmatprep.subr.mxu0 0.0
        %364 = vmatpush1.msra.mxu0 0.0
        %365 = vmatprep.subr.mxu0 0.0
        %366 = vmatpush1.msra.mxu0 0.0
        %367 = vmatprep.mubr.f32.mxu0 0.0
        %368 = vmatmul.mubr.f32.gmra.mrb[0].mxu0 %v227
        %v369 = vpop.f32.mrb[0].mxu0
        %v370 = vadd.f32 0.0, %v369
        %v371 = vpop.f32.mrb[0].mxu0
        %372 = vdwg.mxu0
        %v373 = vld [vmem:[%s3] sm:$0xff]
        %v374 = vld [vmem:[%s3 + $0x8] sm:$0xff]
        %v375 = vld [vmem:[%s3 + $0x10] sm:$0xff]
        %v376 = vld [vmem:[%s3 + $0x18] sm:$0xff]
        %377 = vmatprep.subr.mxu0 0.0
        %378 = vmatpush1.msra.mxu0 %v373
        %379 = vmatprep.subr.mxu0 0.0
        %380 = vmatpush1.msra.mxu0 %v374
        %381 = vmatprep.subr.mxu0 0.0
        %382 = vmatpush1.msra.mxu0 %v375
        %383 = vmatprep.subr.mxu0 0.0
        %384 = vmatpush1.msra.mxu0 %v376
        %385 = vmatprep.subr.mxu0 0.0
        %386 = vmatpush1.msra.mxu0 0.0
        %387 = vmatprep.subr.mxu0 0.0
        %388 = vmatpush1.msra.mxu0 0.0
        %389 = vmatprep.subr.mxu0 0.0
        %390 = vmatpush1.msra.mxu0 0.0
        %391 = vmatprep.subr.mxu0 0.0
        %392 = vmatpush1.msra.mxu0 0.0
        %393 = vmatprep.subr.mxu0 0.0
        %394 = vmatpush1.msra.mxu0 0.0
        %395 = vmatprep.subr.mxu0 0.0
        %396 = vmatpush1.msra.mxu0 0.0
        %397 = vmatprep.subr.mxu0 0.0
        %398 = vmatpush1.msra.mxu0 0.0
        %399 = vmatprep.subr.mxu0 0.0
        %400 = vmatpush1.msra.mxu0 0.0
        %401 = vmatprep.subr.mxu0 0.0
        %402 = vmatpush1.msra.mxu0 0.0
        %403 = vmatprep.subr.mxu0 0.0
        %404 = vmatpush1.msra.mxu0 0.0
        %405 = vmatprep.subr.mxu0 0.0
        %406 = vmatpush1.msra.mxu0 0.0
        %407 = vmatprep.subr.mxu0 0.0
        %408 = vmatpush1.msra.mxu0 0.0
        %409 = vmatprep.subr.mxu0 0.0
        %410 = vmatpush1.msra.mxu0 0.0
        %411 = vmatprep.subr.mxu0 0.0
        %412 = vmatpush1.msra.mxu0 0.0
        %413 = vmatprep.subr.mxu0 0.0
        %414 = vmatpush1.msra.mxu0 0.0
        %415 = vmatprep.subr.mxu0 0.0
        %416 = vmatpush1.msra.mxu0 0.0
        %417 = vmatprep.subr.mxu0 0.0
        %418 = vmatpush1.msra.mxu0 0.0
        %419 = vmatprep.subr.mxu0 0.0
        %420 = vmatpush1.msra.mxu0 0.0
        %421 = vmatprep.subr.mxu0 0.0
        %422 = vmatpush1.msra.mxu0 0.0
        %423 = vmatprep.subr.mxu0 0.0
        %424 = vmatpush1.msra.mxu0 0.0
        %425 = vmatprep.subr.mxu0 0.0
        %426 = vmatpush1.msra.mxu0 0.0
        %427 = vmatprep.subr.mxu0 0.0
        %428 = vmatpush1.msra.mxu0 0.0
        %429 = vmatprep.subr.mxu0 0.0
        %430 = vmatpush1.msra.mxu0 0.0
        %431 = vmatprep.subr.mxu0 0.0
        %432 = vmatpush1.msra.mxu0 0.0
        %433 = vmatprep.subr.mxu0 0.0
        %434 = vmatpush1.msra.mxu0 0.0
        %435 = vmatprep.subr.mxu0 0.0
        %436 = vmatpush1.msra.mxu0 0.0
        %437 = vmatprep.subr.mxu0 0.0
        %438 = vmatpush1.msra.mxu0 0.0
        %439 = vmatprep.subr.mxu0 0.0
        %440 = vmatpush1.msra.mxu0 0.0
        %441 = vmatprep.mubr.f32.mxu0 0.0
        %442 = vmatmul.mubr.f32.gmra.mrb[0].mxu0 %v227
        %v443 = vpop.f32.mrb[0].mxu0
        %v444 = vadd.f32 0.0, %v443
        %v445 = vpop.f32.mrb[0].mxu0
        %446 = vdwg.mxu0
        %vm447 = vcmask 130048
        %v449 = vsel %vm447, %v296, 0
        %v452 = vsel %vm447, %v370, 0
        %454 = vmatprep.subr.mxu0 0.0
        %455 = vmatpush1.xpose.msra.mxu0 %v452
        %456 = vmatprep.subr.mxu0 0.0
        %457 = vmatpush1.xpose.msra.mxu0 0.0
        %458 = vmatprep.subr.mxu0 0.0
        %459 = vmatpush1.xpose.msra.mxu0 0.0
        %460 = vmatprep.subr.mxu0 0.0
        %461 = vmatpush1.xpose.msra.mxu0 0.0
        %462 = vmatprep.subr.mxu0 0.0
        %463 = vmatpush1.xpose.msra.mxu0 0.0
        %464 = vmatprep.subr.mxu0 0.0
        %465 = vmatpush1.xpose.msra.mxu0 0.0
        %466 = vmatprep.subr.mxu0 0.0
        %467 = vmatpush1.xpose.msra.mxu0 0.0
        %468 = vmatprep.subr.mxu0 0.0
        %469 = vmatpush1.xpose.msra.mxu0 0.0
        %470 = vmatprep.subr.mxu0 0.0
        %471 = vmatpush1.xpose.msra.mxu0 0.0
        %472 = vmatprep.subr.mxu0 0.0
        %473 = vmatpush1.xpose.msra.mxu0 0.0
        %474 = vmatprep.subr.mxu0 0.0
        %475 = vmatpush1.xpose.msra.mxu0 0.0
        %476 = vmatprep.subr.mxu0 0.0
        %477 = vmatpush1.xpose.msra.mxu0 0.0
        %478 = vmatprep.subr.mxu0 0.0
        %479 = vmatpush1.xpose.msra.mxu0 0.0
        %480 = vmatprep.subr.mxu0 0.0
        %481 = vmatpush1.xpose.msra.mxu0 0.0
        %482 = vmatprep.subr.mxu0 0.0
        %483 = vmatpush1.xpose.msra.mxu0 0.0
        %484 = vmatprep.subr.mxu0 0.0
        %485 = vmatpush1.xpose.msra.mxu0 0.0
        %486 = vmatprep.subr.mxu0 0.0
        %487 = vmatpush1.xpose.msra.mxu0 0.0
        %488 = vmatprep.subr.mxu0 0.0
        %489 = vmatpush1.xpose.msra.mxu0 0.0
        %490 = vmatprep.subr.mxu0 0.0
        %491 = vmatpush1.xpose.msra.mxu0 0.0
        %492 = vmatprep.subr.mxu0 0.0
        %493 = vmatpush1.xpose.msra.mxu0 0.0
        %494 = vmatprep.subr.mxu0 0.0
        %495 = vmatpush1.xpose.msra.mxu0 0.0
        %496 = vmatprep.subr.mxu0 0.0
        %497 = vmatpush1.xpose.msra.mxu0 0.0
        %498 = vmatprep.subr.mxu0 0.0
        %499 = vmatpush1.xpose.msra.mxu0 0.0
        %500 = vmatprep.subr.mxu0 0.0
        %501 = vmatpush1.xpose.msra.mxu0 0.0
        %502 = vmatprep.subr.mxu0 0.0
        %503 = vmatpush1.xpose.msra.mxu0 0.0
        %504 = vmatprep.subr.mxu0 0.0
        %505 = vmatpush1.xpose.msra.mxu0 0.0
        %506 = vmatprep.subr.mxu0 0.0
        %507 = vmatpush1.xpose.msra.mxu0 0.0
        %508 = vmatprep.subr.mxu0 0.0
        %509 = vmatpush1.xpose.msra.mxu0 0.0
        %510 = vmatprep.subr.mxu0 0.0
        %511 = vmatpush1.xpose.msra.mxu0 0.0
        %512 = vmatprep.subr.mxu0 0.0
        %513 = vmatpush1.xpose.msra.mxu0 0.0
        %514 = vmatprep.subr.mxu0 0.0
        %515 = vmatpush1.xpose.msra.mxu0 0.0
        %516 = vmatprep.subr.mxu0 0.0
        %517 = vmatpush1.xpose.msra.mxu0 0.0
        %518 = vmatprep.mubr.f32.mxu0 0.0
        %519 = vmatmul.mubr.f32.gmra.mrb[0].mxu0 %v449
        %v520 = vpop.f32.mrb[0].mxu0
        %v521 = vadd.f32 0.0, %v520
        %v522 = vpop.f32.mrb[0].mxu0
        %523 = vdwg.mxu0
        %vm524 = vcmask 64512
        %v525 = vsel %vm524, %v521, -inf
        %526 = vmax.xlane.f32.xlu0 %v525
        %v527 = vpop.xlane.xlu0 %526
        %v528 = vsub.f32 %v521, %v527
        %v529 = vmul.f32 %v528, 1.442695
        %v530 = vpow.pop %v529
        %v531 = vsel %vm524, %v530, 0.0
        %532 = vadd.xlane.f32.xlu0 %v531
        %v533 = vpop.xlane.xlu0 %532
        %v534 = vrcp.pop %v533
        %v535 = vmul.f32 %v530, %v534
        %v537 = vsel %vm524, %v535, 0
        %539 = vmatprep.subr.mxu0 0.0
        %540 = vmatpush1.msra.mxu0 %v444
        %541 = vmatprep.subr.mxu0 0.0
        %542 = vmatpush1.msra.mxu0 0.0
        %543 = vmatprep.subr.mxu0 0.0
        %544 = vmatpush1.msra.mxu0 0.0
        %545 = vmatprep.subr.mxu0 0.0
        %546 = vmatpush1.msra.mxu0 0.0
        %547 = vmatprep.subr.mxu0 0.0
        %548 = vmatpush1.msra.mxu0 0.0
        %549 = vmatprep.subr.mxu0 0.0
        %550 = vmatpush1.msra.mxu0 0.0
        %551 = vmatprep.subr.mxu0 0.0
        %552 = vmatpush1.msra.mxu0 0.0
        %553 = vmatprep.subr.mxu0 0.0
        %554 = vmatpush1.msra.mxu0 0.0
        %555 = vmatprep.subr.mxu0 0.0
        %556 = vmatpush1.msra.mxu0 0.0
        %557 = vmatprep.subr.mxu0 0.0
        %558 = vmatpush1.msra.mxu0 0.0
        %559 = vmatprep.subr.mxu0 0.0
        %560 = vmatpush1.msra.mxu0 0.0
        %561 = vmatprep.subr.mxu0 0.0
        %562 = vmatpush1.msra.mxu0 0.0
        %563 = vmatprep.subr.mxu0 0.0
        %564 = vmatpush1.msra.mxu0 0.0
        %565 = vmatprep.subr.mxu0 0.0
        %566 = vmatpush1.msra.mxu0 0.0
        %567 = vmatprep.subr.mxu0 0.0
        %568 = vmatpush1.msra.mxu0 0.0
        %569 = vmatprep.subr.mxu0 0.0
        %570 = vmatpush1.msra.mxu0 0.0
        %571 = vmatprep.subr.mxu0 0.0
        %572 = vmatpush1.msra.mxu0 0.0
        %573 = vmatprep.subr.mxu0 0.0
        %574 = vmatpush1.msra.mxu0 0.0
        %575 = vmatprep.subr.mxu0 0.0
        %576 = vmatpush1.msra.mxu0 0.0
        %577 = vmatprep.subr.mxu0 0.0
        %578 = vmatpush1.msra.mxu0 0.0
        %579 = vmatprep.subr.mxu0 0.0
        %580 = vmatpush1.msra.mxu0 0.0
        %581 = vmatprep.subr.mxu0 0.0
        %582 = vmatpush1.msra.mxu0 0.0
        %583 = vmatprep.subr.mxu0 0.0
        %584 = vmatpush1.msra.mxu0 0.0
        %585 = vmatprep.subr.mxu0 0.0
        %586 = vmatpush1.msra.mxu0 0.0
        %587 = vmatprep.subr.mxu0 0.0
        %588 = vmatpush1.msra.mxu0 0.0
        %589 = vmatprep.subr.mxu0 0.0
        %590 = vmatpush1.msra.mxu0 0.0
        %591 = vmatprep.subr.mxu0 0.0
        %592 = vmatpush1.msra.mxu0 0.0
        %593 = vmatprep.subr.mxu0 0.0
        %594 = vmatpush1.msra.mxu0 0.0
        %595 = vmatprep.subr.mxu0 0.0
        %596 = vmatpush1.msra.mxu0 0.0
        %597 = vmatprep.subr.mxu0 0.0
        %598 = vmatpush1.msra.mxu0 0.0
        %599 = vmatprep.subr.mxu0 0.0
        %600 = vmatpush1.msra.mxu0 0.0
        %601 = vmatprep.subr.mxu0 0.0
        %602 = vmatpush1.msra.mxu0 0.0
        %603 = vmatprep.mubr.f32.mxu0 0.0
        %604 = vmatmul.mubr.f32.gmra.mrb[0].mxu0 %v537
        %v605 = vpop.f32.mrb[0].mxu0
        %v606 = vadd.f32 0.0, %v605
        %v607 = vpop.f32.mrb[0].mxu0
        %608 = vdwg.mxu0
        %v609 = vld [vmem:[%s4] sm:$0xff]
        %v610 = vld [vmem:[%s4 + $0x8] sm:$0xff]
        %v612 = vsel %vm447, %v606, 0
        %614 = vmatprep.subr.mxu0 0.0
        %615 = vmatpush1.msra.mxu0 %v609
        %616 = vmatprep.subr.mxu0 0.0
        %617 = vmatpush1.msra.mxu0 %v610
        %618 = vmatprep.subr.mxu0 0.0
        %619 = vmatpush1.msra.mxu0 0.0
        %620 = vmatprep.subr.mxu0 0.0
        %621 = vmatpush1.msra.mxu0 0.0
        %622 = vmatprep.subr.mxu0 0.0
        %623 = vmatpush1.msra.mxu0 0.0
        %624 = vmatprep.subr.mxu0 0.0
        %625 = vmatpush1.msra.mxu0 0.0
        %626 = vmatprep.subr.mxu0 0.0
        %627 = vmatpush1.msra.mxu0 0.0
        %628 = vmatprep.subr.mxu0 0.0
        %629 = vmatpush1.msra.mxu0 0.0
        %630 = vmatprep.subr.mxu0 0.0
        %631 = vmatpush1.msra.mxu0 0.0
        %632 = vmatprep.subr.mxu0 0.0
        %633 = vmatpush1.msra.mxu0 0.0
        %634 = vmatprep.subr.mxu0 0.0
        %635 = vmatpush1.msra.mxu0 0.0
        %636 = vmatprep.subr.mxu0 0.0
        %637 = vmatpush1.msra.mxu0 0.0
        %638 = vmatprep.subr.mxu0 0.0
        %639 = vmatpush1.msra.mxu0 0.0
        %640 = vmatprep.subr.mxu0 0.0
        %641 = vmatpush1.msra.mxu0 0.0
        %642 = vmatprep.subr.mxu0 0.0
        %643 = vmatpush1.msra.mxu0 0.0
        %644 = vmatprep.subr.mxu0 0.0
        %645 = vmatpush1.msra.mxu0 0.0
        %646 = vmatprep.subr.mxu0 0.0
        %647 = vmatpush1.msra.mxu0 0.0
        %648 = vmatprep.subr.mxu0 0.0
        %649 = vmatpush1.msra.mxu0 0.0
        %650 = vmatprep.subr.mxu0 0.0
        %651 = vmatpush1.msra.mxu0 0.0
        %652 = vmatprep.subr.mxu0 0.0
        %653 = vmatpush1.msra.mxu0 0.0
        %654 = vmatprep.subr.mxu0 0.0
        %655 = vmatpush1.msra.mxu0 0.0
        %656 = vmatprep.subr.mxu0 0.0
        %657 = vmatpush1.msra.mxu0 0.0
        %658 = vmatprep.subr.mxu0 0.0
        %659 = vmatpush1.msra.mxu0 0.0
        %660 = vmatprep.subr.mxu0 0.0
        %661 = vmatpush1.msra.mxu0 0.0
        %662 = vmatprep.subr.mxu0 0.0
        %663 = vmatpush1.msra.mxu0 0.0
        %664 = vmatprep.subr.mxu0 0.0
        %665 = vmatpush1.msra.mxu0 0.0
        %666 = vmatprep.subr.mxu0 0.0
        %667 = vmatpush1.msra.mxu0 0.0
        %668 = vmatprep.subr.mxu0 0.0
        %669 = vmatpush1.msra.mxu0 0.0
        %670 = vmatprep.subr.mxu0 0.0
        %671 = vmatpush1.msra.mxu0 0.0
        %672 = vmatprep.subr.mxu0 0.0
        %673 = vmatpush1.msra.mxu0 0.0
        %674 = vmatprep.subr.mxu0 0.0
        %675 = vmatpush1.msra.mxu0 0.0
        %676 = vmatprep.subr.mxu0 0.0
        %677 = vmatpush1.msra.mxu0 0.0
        %678 = vmatprep.mubr.f32.mxu0 0.0
        %679 = vmatmul.mubr.f32.gmra.mrb[0].mxu0 %v612
        %v680 = vpop.f32.mrb[0].mxu0
        %v681 = vadd.f32 0.0, %v680
        %v682 = vpop.f32.mrb[0].mxu0
        %683 = vdwg.mxu0
        %684 = vst.msk [vmem:[%s215] sm:$0xff] %vm225, %v681
        %s685 = sand.u32 %s137, 1
        %s686 = scalar_lea.sflag [#allocation3], %s685
        %s687 = sand.u32 %s137, 1
        %s688 = smul.addr %s687, 8
        %s689 = scalar_lea.vmem [#allocation2], %s688
        // Predicated region
        $region41: #{tpu_custom_call.1} parent=39 // pred_check
          %p690 = pneg %p147
        $region42: #{tpu_custom_call.1} parent=39 // pred_check_branch
          %692 = sbr.rel (%p690) target = $region44
        $region43: #{tpu_custom_call.1} parent=39 // pred_region
          %s694 = ssub.s32 128, 128
          %695 = vsyncadd %s686, %s694
          %s696 = smul.addr %s19, 128
          %s697 = scalar_lea.hbm %s5, %s696
          %s699 = sshll.u32 %s689, 4
          %s700 = int_to_ptr.vmem [resolvable:$true] %s699
          %702 = dma.vmem_to_hbm [thread:$0]  %s700, 128, %s697, %s686
        $region44: #{tpu_custom_call.1} parent=39 // pred_fallthru
          _
      $region40: #{tpu_custom_call.1} parent=5 // pred_fallthru
        _
      %p703 = scmp.le.s32.totalorder 2, %s14
      // Predicated region
      $region45: #{tpu_custom_call.1} parent=5 // pred_check
        %p704 = pneg %p703
      $region46: #{tpu_custom_call.1} parent=5 // pred_check_branch
        %706 = sbr.rel (%p704) target = $region48
      $region47: #{tpu_custom_call.1} parent=5 // pred_region
        %s707 = ssub.s32 %s14, 2
        // Predicated region
        $region49: #{tpu_custom_call.1} parent=47 // pred_check
          %p708 = pneg %p153
        $region50: #{tpu_custom_call.1} parent=47 // pred_check_branch
          %710 = sbr.rel (%p708) target = $region52
        $region51: #{tpu_custom_call.1} parent=47 // pred_region
          %s711 = sand.u32 %s138, 1
          %s712 = scalar_lea.sflag [#allocation3], %s711
          %s713 = sand.u32 %s138, 1
          %s714 = smul.addr %s713, 8
          %s715 = scalar_lea.vmem [#allocation2], %s714
          %716 = dma.done %s712, 128
        $region52: #{tpu_custom_call.1} parent=47 // pred_fallthru
          _
      $region48: #{tpu_custom_call.1} parent=5 // pred_fallthru
        _
    $region6: #{tpu_custom_call.1} parent=1 // loop_footer
      %s18 = sadd.s32 1, %s14
    $region7: #{tpu_custom_call.1} parent=1 // loop_footer_branch
      %13 = sbr.rel target = $region3
    $region8: #{tpu_custom_call.1} parent=1 // loop_exit
      _
    %717 = vsyncpa [#allocation3], 1
    %s718 = scalar_lea.sflag [#allocation3], 1
    %719 = vsyncpa %s718, 1

</llo_original>
